<compile_context>
chip_gen: v7x
topology: tpu7x:2x2x1
jax: 0.10.0
libtpu: 0.0.40
codegen_flags: <defaults>
</compile_context>

<pallas_src>
import functools

import jax
import jax.numpy as jnp
from jax.experimental import pallas as pl
from jax.experimental.pallas import tpu as pltpu


def _round_up(x, m):
    return (x + m - 1) // m * m


def _cdiv(a, b):
    return -(-a // b)


def _default_vmem_budget_bytes():
    """Per-chip VMEM budget: physical capacity minus ~12% compiler headroom."""
    cap = None
    try:
        cap = getattr(pltpu.get_tpu_info(), "vmem_capacity_bytes", None)
    except Exception:
        cap = None
    if not cap:
        cap = 64 * 1024 * 1024  # conservative fallback (v7x per-TC VMEM)
    return int(cap * 0.88)


def _layernorm_bf16(x_ref, g_ref, beta_ref, *, eps, valid_dim):
    """f32 LayerNorm of the current tile, returned as bf16.

    Pad columns are zero in x and in gamma/beta, so they stay exactly zero in
    the output.  var = E[x^2] - mean^2; pad columns are zero so both sums are
    exact over the valid columns (no iota/where mask pass needed)."""
    x = x_ref[...].astype(jnp.float32)
    inv_n = jnp.float32(1.0 / valid_dim)
    mean = jnp.sum(x, axis=-1, keepdims=True) * inv_n
    var = jnp.sum(x * x, axis=-1, keepdims=True) * inv_n - mean * mean
    h = (x - mean) * jax.lax.rsqrt(var + eps)
    h = h * g_ref[...].astype(jnp.float32) + beta_ref[...].astype(jnp.float32)
    return h.astype(jnp.bfloat16)


def ffn_resident_kernel(x_ref, g_ref, beta_ref, w1_ref, b1_ref, w2_ref, b2_ref,
                        o_ref, *, use_layernorm, use_res, eps, valid_dim):
    """Both weight matrices resident in VMEM; single grid axis over row tiles."""
    if use_layernorm:
        h = _layernorm_bf16(x_ref, g_ref, beta_ref, eps=eps, valid_dim=valid_dim)
    else:
        h = x_ref[...].astype(jnp.bfloat16)
    # Linear(res -> ff) + ReLU.  bf16 MXU inputs, f32 accumulation.
    h1 = jnp.dot(h, w1_ref[...], preferred_element_type=jnp.float32)
    h1 = jnp.maximum(h1 + b1_ref[...].astype(jnp.float32), 0.0).astype(jnp.bfloat16)
    # Linear(ff -> res).
    out = jnp.dot(h1, w2_ref[...], preferred_element_type=jnp.float32)
    out = out + b2_ref[...].astype(jnp.float32)
    if use_res:
        # Re-read the (still-resident) input tile so the f32 x value does not
        # stay live across both matmuls.
        out = out + x_ref[...].astype(jnp.float32)
    o_ref[...] = out.astype(o_ref.dtype)


def ffn_ff_tiled_kernel(x_ref, g_ref, beta_ref, w1_ref, b1_ref, w2_ref, b2_ref,
                        o_ref, h_scr, acc_scr, *, use_layernorm, use_res, eps,
                        valid_dim):
    """Streams ff-dim blocks of w1/w2 over grid axis 1 ('arbitrary').

    LayerNorm is computed once per row tile (k == 0) and cached in a bf16
    scratch; the second matmul accumulates into an f32 scratch; the output is
    written on the last k step."""
    k = pl.program_id(1)

    @pl.when(k == 0)
    def _():
        if use_layernorm:
            h_scr[...] = _layernorm_bf16(x_ref, g_ref, beta_ref,
                                         eps=eps, valid_dim=valid_dim)
        else:
            h_scr[...] = x_ref[...].astype(jnp.bfloat16)
        acc_scr[...] = jnp.zeros_like(acc_scr)

    h1 = jnp.dot(h_scr[...], w1_ref[...], preferred_element_type=jnp.float32)
    h1 = jnp.maximum(h1 + b1_ref[...].astype(jnp.float32), 0.0).astype(jnp.bfloat16)
    acc_scr[...] += jnp.dot(h1, w2_ref[...], preferred_element_type=jnp.float32)

    @pl.when(k == pl.num_programs(1) - 1)
    def _():
        out = acc_scr[...] + b2_ref[...].astype(jnp.float32)
        if use_res:
            out = out + x_ref[...].astype(jnp.float32)
        o_ref[...] = out.astype(o_ref.dtype)


def _resident_vmem_need(block_m, res_p, ff_p, itemsize):
    weights = 2 * 2 * res_p * ff_p                         # bf16 w1 + w2, 1 buffer
    tiles = 2 * 2 * block_m * res_p * itemsize             # x + out tiles, 2 buffers
    interm = block_m * ff_p * 6 + 2 * block_m * res_p * 4  # h1 (f32+bf16), x/h f32
    vecs = 4 * 4 * (2 * res_p + ff_p + res_p)              # gamma/beta/b1/b2
    return weights + tiles + interm + vecs


def _ff_tiled_vmem_need(block_m, res_p, tf, itemsize):
    weights = 2 * 2 * 2 * res_p * tf                       # bf16 w1/w2 blocks, 2 buffers
    tiles = 2 * 2 * block_m * res_p * itemsize
    scratch = block_m * res_p * (2 + 4)                    # h bf16 + acc f32
    interm = block_m * tf * 6 + block_m * res_p * 4
    vecs = 4 * 4 * (2 * res_p + tf + res_p)
    return weights + tiles + scratch + interm + vecs


def transformer_ff_pallas(x, params, *, use_layernorm=True, use_res=True,
                          block_m=256, eps=1e-5, ff_block=None,
                          vmem_budget_bytes=None):
    """Forward pass of TransformerFFlayers.  x: (..., res_dim).

    params: dict with w1 (res_dim, ff_dim), b1 (ff_dim,), w2 (ff_dim, res_dim),
    b2 (res_dim,) and optionally gamma/beta (res_dim,).  ff_block forces the
    ff-streaming path with that block size (testing / tuning)."""
    orig_shape = x.shape
    res_dim = orig_shape[-1]
    x2d = x.reshape(-1, res_dim)
    M = x2d.shape[0]
    ff_dim = params["w1"].shape[1]
    itemsize = jnp.dtype(x.dtype).itemsize

    # Feature dims: pad to full 128-lane vregs only when not already aligned.
    res_p = _round_up(res_dim, 128)
    ff_p = _round_up(ff_dim, 128)

    # Row tiling: no row padding -- grid is cdiv(M, block_m) and Pallas masks
    # the partial last tile.  Guarantee >= 2 row tiles whenever M > 8 so the
    # "parallel" axis can shard across v7x's two TensorCores.
    block_m = _round_up(max(1, min(block_m, M)), 8)
    if M > 8 and _cdiv(M, block_m) < 2:
        block_m = max(8, _round_up(_cdiv(M, 2), 8))
    grid_m = _cdiv(M, block_m)

    # Inputs / parameters.  Feature pads are zero; padded weight rows/cols and
    # padded gamma/beta keep the pad lanes exactly zero through the kernel.
    if res_p != res_dim:
        xp = jnp.zeros((M, res_p), x.dtype).at[:, :res_dim].set(x2d)
    else:
        xp = x2d

    def row_vec(v, n, dtype):
        v = jnp.asarray(v).reshape(1, -1).astype(dtype)
        if v.shape[1] == n:
            return v
        return jnp.zeros((1, n), dtype).at[:, :v.shape[1]].set(v)

    def mat(w, r, c, dtype):
        w = jnp.asarray(w).astype(dtype)
        if w.shape == (r, c):
            return w
        return jnp.zeros((r, c), dtype).at[:w.shape[0], :w.shape[1]].set(w)

    gamma_v = params.get("gamma", jnp.ones((res_dim,), jnp.float32))
    beta_v = params.get("beta", jnp.zeros((res_dim,), jnp.float32))
    gamma = row_vec(gamma_v, res_p, jnp.float32)
    beta = row_vec(beta_v, res_p, jnp.float32)
    w1 = mat(params["w1"], res_p, ff_p, jnp.bfloat16)   # (res_p, ff_p)
    b1 = row_vec(params["b1"], ff_p, jnp.float32)
    w2 = mat(params["w2"], ff_p, res_p, jnp.bfloat16)   # (ff_p, res_p)
    b2 = row_vec(params["b2"], res_p, jnp.float32)

    if vmem_budget_bytes is None:
        vmem_budget_bytes = _default_vmem_budget_bytes()

    resident_need = _resident_vmem_need(block_m, res_p, ff_p, itemsize)
    use_ff_tiling = (ff_block is not None) or \
        (int(resident_need * 1.15) > vmem_budget_bytes)

    common = dict(use_layernorm=use_layernorm, use_res=use_res, eps=eps,
                  valid_dim=res_dim)

    def const_spec(shape, index_map):
        # Constant-index operands never change between grid steps: single
        # buffering keeps exactly one copy of the weights/vectors resident.
        return pl.BlockSpec(shape, index_map, pipeline_mode=pl.Buffered(1))

    if not use_ff_tiling:
        vmem_limit = int(min(vmem_budget_bytes,
                             max(int(resident_need * 1.5), 32 * 1024 * 1024)))
        out2d = pl.pallas_call(
            functools.partial(ffn_resident_kernel, **common),
            out_shape=jax.ShapeDtypeStruct((M, res_p), x.dtype),
            grid_spec=pltpu.PrefetchScalarGridSpec(
                num_scalar_prefetch=0,
                grid=(grid_m,),
                in_specs=[
                    pl.BlockSpec((block_m, res_p), lambda i: (i, 0)),   # x tile
                    const_spec((1, res_p), lambda i: (0, 0)),           # gamma
                    const_spec((1, res_p), lambda i: (0, 0)),           # beta
                    const_spec((res_p, ff_p), lambda i: (0, 0)),        # w1
                    const_spec((1, ff_p), lambda i: (0, 0)),            # b1
                    const_spec((ff_p, res_p), lambda i: (0, 0)),        # w2
                    const_spec((1, res_p), lambda i: (0, 0)),           # b2
                ],
                out_specs=pl.BlockSpec((block_m, res_p), lambda i: (i, 0)),
            ),
            compiler_params=pltpu.CompilerParams(
                dimension_semantics=("parallel",),
                vmem_limit_bytes=vmem_limit),
        )(xp, gamma, beta, w1, b1, w2, b2)
    else:
        if ff_block is not None:
            tf = int(ff_block)
        else:
            tf = 128
            for cand in (4096, 2048, 1024, 512, 256):
                if (cand <= ff_p and ff_p % cand == 0 and
                        _ff_tiled_vmem_need(block_m, res_p, cand, itemsize)
                        <= vmem_budget_bytes):
                    tf = cand
                    break
        assert ff_p % tf == 0 and tf % 128 == 0, "ff_block must divide padded ff_dim"
        tiled_need = _ff_tiled_vmem_need(block_m, res_p, tf, itemsize)
        vmem_limit = int(min(vmem_budget_bytes,
                             max(int(tiled_need * 1.5), 32 * 1024 * 1024)))
        out2d = pl.pallas_call(
            functools.partial(ffn_ff_tiled_kernel, **common),
            out_shape=jax.ShapeDtypeStruct((M, res_p), x.dtype),
            grid_spec=pltpu.PrefetchScalarGridSpec(
                num_scalar_prefetch=0,
                grid=(grid_m, ff_p // tf),
                in_specs=[
                    pl.BlockSpec((block_m, res_p), lambda i, k: (i, 0)),  # x tile
                    const_spec((1, res_p), lambda i, k: (0, 0)),          # gamma
                    const_spec((1, res_p), lambda i, k: (0, 0)),          # beta
                    pl.BlockSpec((res_p, tf), lambda i, k: (0, k)),       # w1 blk
                    pl.BlockSpec((1, tf), lambda i, k: (0, k)),           # b1 blk
                    pl.BlockSpec((tf, res_p), lambda i, k: (k, 0)),       # w2 blk
                    const_spec((1, res_p), lambda i, k: (0, 0)),          # b2
                ],
                out_specs=pl.BlockSpec((block_m, res_p), lambda i, k: (i, 0)),
                scratch_shapes=[
                    pltpu.VMEM((block_m, res_p), jnp.bfloat16),   # cached LN out
                    pltpu.VMEM((block_m, res_p), jnp.float32),    # f32 accumulator
                ],
            ),
            compiler_params=pltpu.CompilerParams(
                dimension_semantics=("parallel", "arbitrary"),
                vmem_limit_bytes=vmem_limit),
        )(xp, gamma, beta, w1, b1, w2, b2)

    if res_p != res_dim:
        out2d = out2d[:, :res_dim]
    return out2d.reshape(orig_shape)


def reference_ff(x, params, *, use_layernorm=True, use_res=True, eps=1e-5):
    xf = x.astype(jnp.float32)
    if use_layernorm:
        mean = jnp.mean(xf, axis=-1, keepdims=True)
        var = jnp.mean((xf - mean) ** 2, axis=-1, keepdims=True)
        h = (xf - mean) / jnp.sqrt(var + eps)
        h = h * params["gamma"] + params["beta"]
    else:
        h = xf
    h1 = jnp.maximum(h @ params["w1"] + params["b1"], 0.0)
    out = h1 @ params["w2"] + params["b2"]
    if use_res:
        out = out + xf
    return out.astype(x.dtype)


if __name__ == "__main__":
    key = jax.random.PRNGKey(0)

    def make_params(k, res_dim, ff_dim):
        kg, kb, kw1, kb1, kw2, kb2 = jax.random.split(k, 6)
        # nn.Linear stores weight as (out, in); we store the transposed (in, out).
        return {
            "gamma": 1.0 + 0.1 * jax.random.normal(kg, (res_dim,), jnp.float32),
            "beta": 0.1 * jax.random.normal(kb, (res_dim,), jnp.float32),
            "w1": jax.random.normal(kw1, (res_dim, ff_dim), jnp.float32)
                  / jnp.sqrt(jnp.float32(res_dim)),
            "b1": 0.01 * jax.random.normal(kb1, (ff_dim,), jnp.float32),
            "w2": jax.random.normal(kw2, (ff_dim, res_dim), jnp.float32)
                  / jnp.sqrt(jnp.float32(ff_dim)),
            "b2": 0.01 * jax.random.normal(kb2, (res_dim,), jnp.float32),
        }

    k0, k1, k2, k3 = jax.random.split(key, 4)

    # Case 1: (seq, batch, res_dim) = (8, 2, 32), ff_dim = 64.  Resident path;
    # feature dim padded 32 -> 128; two row tiles of 8.
    seq, batch, res_dim, ff_dim = 8, 2, 32, 64
    x = jax.random.normal(k0, (seq, batch, res_dim), jnp.float32)
    params = make_params(k1, res_dim, ff_dim)

    out = jax.block_until_ready(
        transformer_ff_pallas(x, params, use_layernorm=True, use_res=True))
    ref = reference_ff(x, params, use_layernorm=True, use_res=True)
    assert out.shape == x.shape
    # bf16 matmul inputs (f32 accumulation) -> looser tolerance than pure f32.
    assert jnp.allclose(out, ref, atol=5e-2, rtol=5e-2), "mismatch (ln+res, resident)"

    out2 = jax.block_until_ready(
        transformer_ff_pallas(x, params, use_layernorm=False, use_res=False))
    ref2 = reference_ff(x, params, use_layernorm=False, use_res=False)
    assert jnp.allclose(out2, ref2, atol=5e-2, rtol=5e-2), "mismatch (plain, resident)"

    # Case 2: 128-aligned features (no pad / no slice at all), M = 64.
    # 2a: forced ff-tiled path (ff_block=128 -> 2 reduction steps) to exercise
    #     the streaming kernel; 2b: resident path on the same input.
    seq2, batch2, res_dim2, ff_dim2 = 16, 4, 128, 256
    x3 = jax.random.normal(k2, (seq2, batch2, res_dim2), jnp.float32)
    params3 = make_params(k3, res_dim2, ff_dim2)
    ref3 = reference_ff(x3, params3, use_layernorm=True, use_res=True)

    out3 = jax.block_until_ready(
        transformer_ff_pallas(x3, params3, use_layernorm=True, use_res=True,
                              ff_block=128))
    assert out3.shape == x3.shape
    assert jnp.allclose(out3, ref3, atol=7.5e-2, rtol=7.5e-2), \
        "mismatch (ln+res, ff-tiled)"

    out4 = jax.block_until_ready(
        transformer_ff_pallas(x3, params3, use_layernorm=True, use_res=True))
    assert jnp.allclose(out4, ref3, atol=7.5e-2, rtol=7.5e-2), \
        "mismatch (ln+res, resident, aligned)"

    print("KERNEL_OK")
</pallas_src>

<mosaic_0001>
module attributes {stable_mosaic.version = 11 : i64} {
  func.func @ffn_resident_kernel(%arg0: i32, %arg1: memref<8x128xf32, #tpu.memory_space<vmem>>, %arg2: memref<1x128xf32, #tpu.memory_space<vmem>>, %arg3: memref<1x128xf32, #tpu.memory_space<vmem>>, %arg4: memref<128x128xbf16, #tpu.memory_space<vmem>>, %arg5: memref<1x128xf32, #tpu.memory_space<vmem>>, %arg6: memref<128x128xbf16, #tpu.memory_space<vmem>>, %arg7: memref<1x128xf32, #tpu.memory_space<vmem>>, %arg8: memref<8x128xf32, #tpu.memory_space<vmem>>) attributes {dimension_semantics = [#tpu.dimension_semantics<parallel>], iteration_bounds = array<i64: 2>, scalar_prefetch = 0 : i64, scratch_operands = 0 : i64, tpu.core_type = #tpu.core_type<tc>, window_params = [{transform_indices = @transform_0, window_bounds = array<i64: 8, 128>}, {pipeline_mode = #tpu.pipeline_mode<synchronous>, transform_indices = @transform_1, window_bounds = array<i64: 1, 128>}, {pipeline_mode = #tpu.pipeline_mode<synchronous>, transform_indices = @transform_2, window_bounds = array<i64: 1, 128>}, {pipeline_mode = #tpu.pipeline_mode<synchronous>, transform_indices = @transform_3, window_bounds = array<i64: 128, 128>}, {pipeline_mode = #tpu.pipeline_mode<synchronous>, transform_indices = @transform_4, window_bounds = array<i64: 1, 128>}, {pipeline_mode = #tpu.pipeline_mode<synchronous>, transform_indices = @transform_5, window_bounds = array<i64: 128, 128>}, {pipeline_mode = #tpu.pipeline_mode<synchronous>, transform_indices = @transform_6, window_bounds = array<i64: 1, 128>}, {transform_indices = @transform_7, window_bounds = array<i64: 8, 128>}]} {
    %c0 = arith.constant 0 : index
    %c0_0 = arith.constant 0 : index
    %0 = vector.load %arg1[%c0, %c0_0] : memref<8x128xf32, #tpu.memory_space<vmem>>, vector<8x128xf32>
    %cst = arith.constant dense<0.000000e+00> : vector<8xf32>
    %1 = vector.multi_reduction <add>, %0, %cst [1] : vector<8x128xf32> to vector<8xf32>
    %2 = vector.shape_cast %1 : vector<8xf32> to vector<8x1xf32>
    %cst_1 = arith.constant 3.125000e-02 : f32
    %3 = vector.broadcast %cst_1 : f32 to vector<8x1xf32>
    %4 = arith.mulf %2, %3 : vector<8x1xf32>
    %5 = arith.mulf %0, %0 : vector<8x128xf32>
    %cst_2 = arith.constant dense<0.000000e+00> : vector<8xf32>
    %6 = vector.multi_reduction <add>, %5, %cst_2 [1] : vector<8x128xf32> to vector<8xf32>
    %7 = vector.shape_cast %6 : vector<8xf32> to vector<8x1xf32>
    %cst_3 = arith.constant 3.125000e-02 : f32
    %8 = vector.broadcast %cst_3 : f32 to vector<8x1xf32>
    %9 = arith.mulf %7, %8 : vector<8x1xf32>
    %10 = arith.mulf %4, %4 : vector<8x1xf32>
    %11 = arith.subf %9, %10 : vector<8x1xf32>
    %12 = vector.broadcast %4 : vector<8x1xf32> to vector<8x128xf32>
    %13 = arith.subf %0, %12 : vector<8x128xf32>
    %cst_4 = arith.constant 9.99999974E-6 : f32
    %14 = vector.broadcast %cst_4 : f32 to vector<8x1xf32>
    %15 = arith.addf %11, %14 : vector<8x1xf32>
    %16 = math.rsqrt %15 : vector<8x1xf32>
    %17 = vector.broadcast %16 : vector<8x1xf32> to vector<8x128xf32>
    %18 = arith.mulf %13, %17 : vector<8x128xf32>
    %c0_5 = arith.constant 0 : index
    %c0_6 = arith.constant 0 : index
    %19 = vector.load %arg2[%c0_5, %c0_6] : memref<1x128xf32, #tpu.memory_space<vmem>>, vector<1x128xf32>
    %20 = vector.broadcast %19 : vector<1x128xf32> to vector<8x128xf32>
    %21 = arith.mulf %18, %20 : vector<8x128xf32>
    %c0_7 = arith.constant 0 : index
    %c0_8 = arith.constant 0 : index
    %22 = vector.load %arg3[%c0_7, %c0_8] : memref<1x128xf32, #tpu.memory_space<vmem>>, vector<1x128xf32>
    %23 = vector.broadcast %22 : vector<1x128xf32> to vector<8x128xf32>
    %24 = arith.addf %21, %23 : vector<8x128xf32>
    %25 = arith.truncf %24 : vector<8x128xf32> to vector<8x128xbf16>
    %c0_9 = arith.constant 0 : index
    %c0_10 = arith.constant 0 : index
    %26 = vector.load %arg4[%c0_9, %c0_10] : memref<128x128xbf16, #tpu.memory_space<vmem>>, vector<128x128xbf16>
    %cst_11 = arith.constant dense<0.000000e+00> : vector<8x128xf32>
    %27 = tpu.matmul %25, %26, %cst_11 {dimension_numbers = #tpu.dot_dimension_numbers<[1], [0], [0], [1], [0, 0, 1, 1], [], []>} : vector<8x128xbf16>, vector<128x128xbf16>, vector<8x128xf32> -> vector<8x128xf32>
    %c0_12 = arith.constant 0 : index
    %c0_13 = arith.constant 0 : index
    %28 = vector.load %arg5[%c0_12, %c0_13] : memref<1x128xf32, #tpu.memory_space<vmem>>, vector<1x128xf32>
    %29 = vector.broadcast %28 : vector<1x128xf32> to vector<8x128xf32>
    %30 = arith.addf %27, %29 : vector<8x128xf32>
    %cst_14 = arith.constant 0.000000e+00 : f32
    %31 = vector.broadcast %cst_14 : f32 to vector<8x128xf32>
    %32 = arith.maximumf %30, %31 : vector<8x128xf32>
    %33 = arith.truncf %32 : vector<8x128xf32> to vector<8x128xbf16>
    %c0_15 = arith.constant 0 : index
    %c0_16 = arith.constant 0 : index
    %34 = vector.load %arg6[%c0_15, %c0_16] : memref<128x128xbf16, #tpu.memory_space<vmem>>, vector<128x128xbf16>
    %cst_17 = arith.constant dense<0.000000e+00> : vector<8x128xf32>
    %35 = tpu.matmul %33, %34, %cst_17 {dimension_numbers = #tpu.dot_dimension_numbers<[1], [0], [0], [1], [0, 0, 1, 1], [], []>} : vector<8x128xbf16>, vector<128x128xbf16>, vector<8x128xf32> -> vector<8x128xf32>
    %c0_18 = arith.constant 0 : index
    %c0_19 = arith.constant 0 : index
    %36 = vector.load %arg7[%c0_18, %c0_19] : memref<1x128xf32, #tpu.memory_space<vmem>>, vector<1x128xf32>
    %37 = vector.broadcast %36 : vector<1x128xf32> to vector<8x128xf32>
    %38 = arith.addf %35, %37 : vector<8x128xf32>
    %c0_20 = arith.constant 0 : index
    %c0_21 = arith.constant 0 : index
    %39 = vector.load %arg1[%c0_20, %c0_21] : memref<8x128xf32, #tpu.memory_space<vmem>>, vector<8x128xf32>
    %40 = arith.addf %38, %39 : vector<8x128xf32>
    %c0_22 = arith.constant 0 : index
    %c0_23 = arith.constant 0 : index
    %41 = vector.load %arg8[%c0_22, %c0_23] : memref<8x128xf32, #tpu.memory_space<vmem>>, vector<8x128xf32>
    tpu.vector_store %arg8[%c0_22, %c0_23], %40 {strides = array<i32>} : memref<8x128xf32, #tpu.memory_space<vmem>>, vector<8x128xf32>,
    return
  }
  func.func @transform_0(%arg0: i32) -> (i32, i32) {
    %c0_i32 = arith.constant 0 : i32
    %c0_i32_0 = arith.constant 0 : i32
    return %arg0, %c0_i32 : i32, i32
  }
  func.func @transform_1(%arg0: i32) -> (i32, i32) {
    %c0_i32 = arith.constant 0 : i32
    %c0_i32_0 = arith.constant 0 : i32
    %c0_i32_1 = arith.constant 0 : i32
    return %c0_i32, %c0_i32_0 : i32, i32
  }
  func.func @transform_2(%arg0: i32) -> (i32, i32) {
    %c0_i32 = arith.constant 0 : i32
    %c0_i32_0 = arith.constant 0 : i32
    %c0_i32_1 = arith.constant 0 : i32
    return %c0_i32, %c0_i32_0 : i32, i32
  }
  func.func @transform_3(%arg0: i32) -> (i32, i32) {
    %c0_i32 = arith.constant 0 : i32
    %c0_i32_0 = arith.constant 0 : i32
    %c0_i32_1 = arith.constant 0 : i32
    return %c0_i32, %c0_i32_0 : i32, i32
  }
  func.func @transform_4(%arg0: i32) -> (i32, i32) {
    %c0_i32 = arith.constant 0 : i32
    %c0_i32_0 = arith.constant 0 : i32
    %c0_i32_1 = arith.constant 0 : i32
    return %c0_i32, %c0_i32_0 : i32, i32
  }
  func.func @transform_5(%arg0: i32) -> (i32, i32) {
    %c0_i32 = arith.constant 0 : i32
    %c0_i32_0 = arith.constant 0 : i32
    %c0_i32_1 = arith.constant 0 : i32
    return %c0_i32, %c0_i32_0 : i32, i32
  }
  func.func @transform_6(%arg0: i32) -> (i32, i32) {
    %c0_i32 = arith.constant 0 : i32
    %c0_i32_0 = arith.constant 0 : i32
    %c0_i32_1 = arith.constant 0 : i32
    return %c0_i32, %c0_i32_0 : i32, i32
  }
  func.func @transform_7(%arg0: i32) -> (i32, i32) {
    %c0_i32 = arith.constant 0 : i32
    %c0_i32_0 = arith.constant 0 : i32
    return %arg0, %c0_i32 : i32, i32
  }
}

</mosaic_0001>

<llo_original>
// kernel: tpu_custom_call.1
$region0: #{tpu_custom_call.1}
  #allocation0 [shape = 'u32[]', space=smem, size = 0x4, offset = 0x4, fixed_abs, tag = 'smem constant byte address 0x4 - core index']
  #allocation1 [shape = 'u32[144,128]{1,0:T(1,128)}', space=vmem, size = 0x12000, scoped, tag = 'internal scratch']
  %s0 = inlined_call_operand.hbm [shape: f32[16,128], index: 0, kind: input, shape index: {}]
  %s1 = inlined_call_operand.vmem [shape: f32[1,128], index: 1, kind: input, shape index: {}]
  %s2 = inlined_call_operand.vmem [shape: f32[1,128], index: 2, kind: input, shape index: {}]
  %s3 = inlined_call_operand.hbm [shape: bf16[128,128], index: 3, kind: input, shape index: {}]
  %s4 = inlined_call_operand.vmem [shape: f32[1,128], index: 4, kind: input, shape index: {}]
  %s5 = inlined_call_operand.hbm [shape: bf16[128,128], index: 5, kind: input, shape index: {}]
  %s6 = inlined_call_operand.vmem [shape: f32[1,128], index: 6, kind: input, shape index: {}]
  %s7 = inlined_call_operand.hbm [shape: f32[16,128], index: 7, kind: output, shape index: {}]
  %s8 = sld [smem:[#allocation0]]
  $region73: #{tpu_custom_call.1} parent=0
    _
  %s10 = ssub.s32 1, %s8
  %s11 = scalar_select 0, %s10, %s8
  $region1: #{tpu_custom_call.1} parent=0
    #allocation2 [shape = 'u8[8192]{0}', space=vmem, size = 0x2000, scoped, tag = 'input window, operand 0']
    #allocation3 [shape = 's32[2]{0}', space=sflag, size = 0x8, scoped, tag = 'scoped memory for tpu_custom_call.1']
    #allocation4 [shape = 's32[2]{0}', space=sflag, size = 0x8, scoped, tag = 'scoped memory for tpu_custom_call.1']
    #allocation5 [shape = 'u8[32768]{0}', space=vmem, size = 0x8000, scoped, tag = 'input window, operand 3, single buffered']
    #allocation6 [shape = 's32[1]{0}', space=sflag, size = 0x4, scoped, tag = 'scoped memory for tpu_custom_call.1']
    #allocation7 [shape = 'u8[32768]{0}', space=vmem, size = 0x8000, scoped, tag = 'input window, operand 5, single buffered']
    #allocation8 [shape = 'u8[8192]{0}', space=vmem, size = 0x2000, scoped, tag = 'output window, operand 0']
    %12 = vsyncpa [#allocation3], 0
    %s13 = scalar_lea.sflag [#allocation3], 1
    %14 = vsyncpa %s13, 0
    %15 = vsyncpa [#allocation6], 0
    %16 = vsyncpa [#allocation4], 0
    %s17 = scalar_lea.sflag [#allocation4], 1
    %18 = vsyncpa %s17, 0
    loop: start=0, step=1, limit=4
    $region2: #{tpu_custom_call.1} parent=1 // loop_pre_header
      _
    $region3: #{tpu_custom_call.1} parent=1 // loop_header
      %s20 = sphi 0, %s24
      %p21 = scmp.ge.s32.totalorder %s20, 4
      %s30 = sphi 0, %s32
      %s33 = sphi 0, %s30
      %s34 = sphi 0, %s33
      %s50 = sphi 0, %s34
      %s54 = sphi 0, %s54
      %s56 = sphi 0, %s54
      %s57 = sphi 0, %s56
      %s71 = sphi 0, %s57
      %s75 = sphi 0, %s75
      %s77 = sphi 0, %s75
      %s78 = sphi 0, %s77
      %s92 = sphi 0, %s78
      %s96 = sphi 0, %s96
      %s98 = sphi 0, %s96
      %s99 = sphi 0, %s98
      %s113 = sphi 0, %s99
      %s117 = sphi 0, %s117
      %s119 = sphi 0, %s117
      %s120 = sphi 0, %s119
      %s134 = sphi 0, %s120
      %s138 = sphi 0, %s138
      %s140 = sphi 0, %s138
      %s141 = sphi 0, %s140
      %s155 = sphi 0, %s141
      %s159 = sphi 0, %s159
      %s161 = sphi 0, %s159
      %s162 = sphi 0, %s161
      %s176 = sphi 0, %s162
      %s182 = sphi 0, %s184
      %s185 = sphi 0, %s182
      %s186 = sphi 0, %s185
      %s202 = sphi 0, %s186
    $region4: #{tpu_custom_call.1} parent=1 // loop_header_branch
      %23 = sbr.rel (%p21) target = $region8
    $region5: #{tpu_custom_call.1} parent=1 // loop_body
      %s25 = ssub.s32 %s20, 1
      %s26 = ssub.s32 %s20, 2
      %s27 = sadd.s32 %s20, 1
      %s28 = ssub.s32 %s20, %s27
      %p29 = scmp.eq.s32.totalorder %s28, 0
      %s31 = sadd.s32 %s30, 1
      %s32 = scalar_select %p29, %s30, %s31
      %p35 = pneg %p29
      %p36 = scmp.eq.s32.totalorder %s20, 1
      %p37 = por %p35, %p36
      %p38 = scmp.ne.s32.totalorder %s30, %s33
      %p39 = scmp.eq.s32.totalorder %s20, 0
      %p40 = por %p38, %p39
      %p41 = scmp.ne.s32.totalorder %s30, %s33
      %p42 = scmp.eq.s32.totalorder %s25, 1
      %p43 = por %p41, %p42
      %p44 = scmp.ne.s32.totalorder %s33, %s34
      %p45 = scmp.eq.s32.totalorder %s25, 0
      %p46 = por %p44, %p45
      %p47 = scmp.ne.s32.totalorder %s33, %s34
      %p48 = scmp.eq.s32.totalorder %s26, 1
      %p49 = por %p47, %p48
      %p51 = scmp.ne.s32.totalorder %s34, %s50
      %p52 = scmp.eq.s32.totalorder %s26, 0
      %p53 = por %p51, %p52
      %s55 = sadd.s32 %s54, 1
      %p58 = scmp.eq.s32.totalorder %s20, 1
      %p59 = scmp.ne.s32.totalorder %s54, %s56
      %p60 = scmp.eq.s32.totalorder %s20, 0
      %p61 = por %p59, %p60
      %p62 = scmp.ne.s32.totalorder %s54, %s56
      %p63 = scmp.eq.s32.totalorder %s25, 1
      %p64 = por %p62, %p63
      %p65 = scmp.ne.s32.totalorder %s56, %s57
      %p66 = scmp.eq.s32.totalorder %s25, 0
      %p67 = por %p65, %p66
      %p68 = scmp.ne.s32.totalorder %s56, %s57
      %p69 = scmp.eq.s32.totalorder %s26, 1
      %p70 = por %p68, %p69
      %p72 = scmp.ne.s32.totalorder %s57, %s71
      %p73 = scmp.eq.s32.totalorder %s26, 0
      %p74 = por %p72, %p73
      %s76 = sadd.s32 %s75, 1
      %p79 = scmp.eq.s32.totalorder %s20, 1
      %p80 = scmp.ne.s32.totalorder %s75, %s77
      %p81 = scmp.eq.s32.totalorder %s20, 0
      %p82 = por %p80, %p81
      %p83 = scmp.ne.s32.totalorder %s75, %s77
      %p84 = scmp.eq.s32.totalorder %s25, 1
      %p85 = por %p83, %p84
      %p86 = scmp.ne.s32.totalorder %s77, %s78
      %p87 = scmp.eq.s32.totalorder %s25, 0
      %p88 = por %p86, %p87
      %p89 = scmp.ne.s32.totalorder %s77, %s78
      %p90 = scmp.eq.s32.totalorder %s26, 1
      %p91 = por %p89, %p90
      %p93 = scmp.ne.s32.totalorder %s78, %s92
      %p94 = scmp.eq.s32.totalorder %s26, 0
      %p95 = por %p93, %p94
      %s97 = sadd.s32 %s96, 1
      %p100 = scmp.eq.s32.totalorder %s20, 1
      %p101 = scmp.ne.s32.totalorder %s96, %s98
      %p102 = scmp.eq.s32.totalorder %s20, 0
      %p103 = por %p101, %p102
      %p104 = scmp.ne.s32.totalorder %s96, %s98
      %p105 = scmp.eq.s32.totalorder %s25, 1
      %p106 = por %p104, %p105
      %p107 = scmp.ne.s32.totalorder %s98, %s99
      %p108 = scmp.eq.s32.totalorder %s25, 0
      %p109 = por %p107, %p108
      %p110 = scmp.ne.s32.totalorder %s98, %s99
      %p111 = scmp.eq.s32.totalorder %s26, 1
      %p112 = por %p110, %p111
      %p114 = scmp.ne.s32.totalorder %s99, %s113
      %p115 = scmp.eq.s32.totalorder %s26, 0
      %p116 = por %p114, %p115
      %s118 = sadd.s32 %s117, 1
      %p121 = scmp.eq.s32.totalorder %s20, 1
      %p122 = scmp.ne.s32.totalorder %s117, %s119
      %p123 = scmp.eq.s32.totalorder %s20, 0
      %p124 = por %p122, %p123
      %p125 = scmp.ne.s32.totalorder %s117, %s119
      %p126 = scmp.eq.s32.totalorder %s25, 1
      %p127 = por %p125, %p126
      %p128 = scmp.ne.s32.totalorder %s119, %s120
      %p129 = scmp.eq.s32.totalorder %s25, 0
      %p130 = por %p128, %p129
      %p131 = scmp.ne.s32.totalorder %s119, %s120
      %p132 = scmp.eq.s32.totalorder %s26, 1
      %p133 = por %p131, %p132
      %p135 = scmp.ne.s32.totalorder %s120, %s134
      %p136 = scmp.eq.s32.totalorder %s26, 0
      %p137 = por %p135, %p136
      %s139 = sadd.s32 %s138, 1
      %p142 = scmp.eq.s32.totalorder %s20, 1
      %p143 = scmp.ne.s32.totalorder %s138, %s140
      %p144 = scmp.eq.s32.totalorder %s20, 0
      %p145 = por %p143, %p144
      %p146 = scmp.ne.s32.totalorder %s138, %s140
      %p147 = scmp.eq.s32.totalorder %s25, 1
      %p148 = por %p146, %p147
      %p149 = scmp.ne.s32.totalorder %s140, %s141
      %p150 = scmp.eq.s32.totalorder %s25, 0
      %p151 = por %p149, %p150
      %p152 = scmp.ne.s32.totalorder %s140, %s141
      %p153 = scmp.eq.s32.totalorder %s26, 1
      %p154 = por %p152, %p153
      %p156 = scmp.ne.s32.totalorder %s141, %s155
      %p157 = scmp.eq.s32.totalorder %s26, 0
      %p158 = por %p156, %p157
      %s160 = sadd.s32 %s159, 1
      %p163 = scmp.eq.s32.totalorder %s20, 1
      %p164 = scmp.ne.s32.totalorder %s159, %s161
      %p165 = scmp.eq.s32.totalorder %s20, 0
      %p166 = por %p164, %p165
      %p167 = scmp.ne.s32.totalorder %s159, %s161
      %p168 = scmp.eq.s32.totalorder %s25, 1
      %p169 = por %p167, %p168
      %p170 = scmp.ne.s32.totalorder %s161, %s162
      %p171 = scmp.eq.s32.totalorder %s25, 0
      %p172 = por %p170, %p171
      %p173 = scmp.ne.s32.totalorder %s161, %s162
      %p174 = scmp.eq.s32.totalorder %s26, 1
      %p175 = por %p173, %p174
      %p177 = scmp.ne.s32.totalorder %s162, %s176
      %p178 = scmp.eq.s32.totalorder %s26, 0
      %p179 = por %p177, %p178
      %s180 = ssub.s32 %s20, %s27
      %p181 = scmp.eq.s32.totalorder %s180, 0
      %s183 = sadd.s32 %s182, 1
      %s184 = scalar_select %p181, %s182, %s183
      %p187 = pneg %p181
      %p188 = scmp.eq.s32.totalorder %s20, 1
      %p189 = por %p187, %p188
      %p190 = scmp.ne.s32.totalorder %s182, %s185
      %p191 = scmp.eq.s32.totalorder %s20, 0
      %p192 = por %p190, %p191
      %p193 = scmp.ne.s32.totalorder %s182, %s185
      %p194 = scmp.eq.s32.totalorder %s25, 1
      %p195 = por %p193, %p194
      %p196 = scmp.ne.s32.totalorder %s185, %s186
      %p197 = scmp.eq.s32.totalorder %s25, 0
      %p198 = por %p196, %p197
      %p199 = scmp.ne.s32.totalorder %s185, %s186
      %p200 = scmp.eq.s32.totalorder %s26, 1
      %p201 = por %p199, %p200
      %p203 = scmp.ne.s32.totalorder %s186, %s202
      %p204 = scmp.eq.s32.totalorder %s26, 0
      %p205 = por %p203, %p204
      %p206 = scmp.le.s32.totalorder 1, %s20
      %p207 = scmp.lt.s32.totalorder %s20, 3
      %p208 = pnand %p206, %p207
      %p209 = pneg %p208
      // Predicated region
      $region9: #{tpu_custom_call.1} parent=5 // pred_check
        _
      $region10: #{tpu_custom_call.1} parent=5 // pred_check_branch
        %211 = sbr.rel (%p208) target = $region12
      $region11: #{tpu_custom_call.1} parent=5 // pred_region
        %s212 = ssub.s32 %s20, 1
        // Predicated region
        $region13: #{tpu_custom_call.1} parent=11 // pred_check
          %p213 = pneg %p67
        $region14: #{tpu_custom_call.1} parent=11 // pred_check_branch
          %215 = sbr.rel (%p213) target = $region16
        $region15: #{tpu_custom_call.1} parent=11 // pred_region
          _
        $region16: #{tpu_custom_call.1} parent=11 // pred_fallthru
          _
        // Predicated region
        $region17: #{tpu_custom_call.1} parent=11 // pred_check
          %p216 = pneg %p88
        $region18: #{tpu_custom_call.1} parent=11 // pred_check_branch
          %218 = sbr.rel (%p216) target = $region20
        $region19: #{tpu_custom_call.1} parent=11 // pred_region
          _
        $region20: #{tpu_custom_call.1} parent=11 // pred_fallthru
          _
        // Predicated region
        $region21: #{tpu_custom_call.1} parent=11 // pred_check
          %p219 = pneg %p109
        $region22: #{tpu_custom_call.1} parent=11 // pred_check_branch
          %221 = sbr.rel (%p219) target = $region24
        $region23: #{tpu_custom_call.1} parent=11 // pred_region
          %s223 = ssub.s32 1024, 1024
          %224 = vsyncadd [#allocation6], %s223
          %s225 = sshll.u32 [#allocation5], 4
          %s226 = int_to_ptr.vmem [resolvable:$true] %s225
          %231 = dma.hbm_to_vmem [thread:$0]  %s3, 1024, %s226, [#allocation6], 64, 64, 4
        $region24: #{tpu_custom_call.1} parent=11 // pred_fallthru
          _
        // Predicated region
        $region25: #{tpu_custom_call.1} parent=11 // pred_check
          %p232 = pneg %p130
        $region26: #{tpu_custom_call.1} parent=11 // pred_check_branch
          %234 = sbr.rel (%p232) target = $region28
        $region27: #{tpu_custom_call.1} parent=11 // pred_region
          _
        $region28: #{tpu_custom_call.1} parent=11 // pred_fallthru
          _
        // Predicated region
        $region29: #{tpu_custom_call.1} parent=11 // pred_check
          %p235 = pneg %p151
        $region30: #{tpu_custom_call.1} parent=11 // pred_check_branch
          %237 = sbr.rel (%p235) target = $region32
        $region31: #{tpu_custom_call.1} parent=11 // pred_region
          %s239 = ssub.s32 1024, 1024
          %240 = vsyncadd [#allocation6], %s239
          %s241 = sshll.u32 [#allocation7], 4
          %s242 = int_to_ptr.vmem [resolvable:$true] %s241
          %247 = dma.hbm_to_vmem [thread:$0]  %s5, 1024, %s242, [#allocation6], 64, 64, 4
        $region32: #{tpu_custom_call.1} parent=11 // pred_fallthru
          _
        // Predicated region
        $region33: #{tpu_custom_call.1} parent=11 // pred_check
          %p248 = pneg %p172
        $region34: #{tpu_custom_call.1} parent=11 // pred_check_branch
          %250 = sbr.rel (%p248) target = $region36
        $region35: #{tpu_custom_call.1} parent=11 // pred_region
          _
        $region36: #{tpu_custom_call.1} parent=11 // pred_fallthru
          _
      $region12: #{tpu_custom_call.1} parent=5 // pred_fallthru
        _
      %p251 = scmp.lt.s32.totalorder %s20, 2
      // Predicated region
      $region37: #{tpu_custom_call.1} parent=5 // pred_check
        %p252 = pneg %p251
      $region38: #{tpu_custom_call.1} parent=5 // pred_check_branch
        %254 = sbr.rel (%p252) target = $region40
      $region39: #{tpu_custom_call.1} parent=5 // pred_region
        // Predicated region
        $region41: #{tpu_custom_call.1} parent=39 // pred_check
          %p255 = pneg %p40
        $region42: #{tpu_custom_call.1} parent=39 // pred_check_branch
          %257 = sbr.rel (%p255) target = $region44
        $region43: #{tpu_custom_call.1} parent=39 // pred_region
          %s258 = sand.u32 %s30, 1
          %s259 = scalar_lea.sflag [#allocation3], %s258
          %s260 = sand.u32 %s30, 1
          %s261 = smul.addr %s260, 8
          %s262 = scalar_lea.vmem [#allocation2], %s261
          %s264 = ssub.s32 128, 128
          %265 = vsyncadd %s259, %s264
          %s266 = smul.addr %s20, 128
          %s267 = scalar_lea.hbm %s0, %s266
          %s269 = sshll.u32 %s262, 4
          %s270 = int_to_ptr.vmem [resolvable:$true] %s269
          %272 = dma.hbm_to_vmem [thread:$0]  %s267, 128, %s270, %s259
        $region44: #{tpu_custom_call.1} parent=39 // pred_fallthru
          _
      $region40: #{tpu_custom_call.1} parent=5 // pred_fallthru
        _
      %p273 = scmp.le.s32.totalorder 1, %s20
      %p274 = scmp.lt.s32.totalorder %s20, 3
      %p275 = pnand %p273, %p274
      %p276 = pneg %p275
      // Predicated region
      $region45: #{tpu_custom_call.1} parent=5 // pred_check
        _
      $region46: #{tpu_custom_call.1} parent=5 // pred_check_branch
        %278 = sbr.rel (%p275) target = $region48
      $region47: #{tpu_custom_call.1} parent=5 // pred_region
        %s279 = ssub.s32 %s20, 1
        %s280 = sand.u32 %s33, 1
        %s281 = scalar_lea.sflag [#allocation3], %s280
        %s282 = sand.u32 %s33, 1
        %s283 = smul.addr %s282, 8
        %s284 = scalar_lea.vmem [#allocation2], %s283
        // Predicated region
        $region49: #{tpu_custom_call.1} parent=47 // pred_check
          %p285 = pneg %p46
        $region50: #{tpu_custom_call.1} parent=47 // pred_check_branch
          %287 = sbr.rel (%p285) target = $region52
        $region51: #{tpu_custom_call.1} parent=47 // pred_region
          %288 = dma.done %s281, 128
        $region52: #{tpu_custom_call.1} parent=47 // pred_fallthru
          _
        // Predicated region
        $region53: #{tpu_custom_call.1} parent=47 // pred_check
          %p289 = pneg %p109
        $region54: #{tpu_custom_call.1} parent=47 // pred_check_branch
          %291 = sbr.rel (%p289) target = $region56
        $region55: #{tpu_custom_call.1} parent=47 // pred_region
          %292 = dma.done [#allocation6], 1024
        $region56: #{tpu_custom_call.1} parent=47 // pred_fallthru
          _
        // Predicated region
        $region57: #{tpu_custom_call.1} parent=47 // pred_check
          %p293 = pneg %p151
        $region58: #{tpu_custom_call.1} parent=47 // pred_check_branch
          %295 = sbr.rel (%p293) target = $region60
        $region59: #{tpu_custom_call.1} parent=47 // pred_region
          %296 = dma.done [#allocation6], 1024
        $region60: #{tpu_custom_call.1} parent=47 // pred_fallthru
          _
        %s297 = sand.u32 %s33, 1
        %s298 = scalar_lea.sflag [#allocation3], %s297
        %s299 = sand.u32 %s33, 1
        %s300 = smul.addr %s299, 8
        %s301 = scalar_lea.vmem [#allocation2], %s300
        %p302 = pneg %p46
        %p303 = pneg %p43
        %p304 = pneg %p67
        %p305 = pneg %p64
        %p306 = pneg %p88
        %p307 = pneg %p85
        %p308 = pneg %p109
        %p309 = pneg %p106
        %p310 = pneg %p130
        %p311 = pneg %p127
        %p312 = pneg %p151
        %p313 = pneg %p148
        %p314 = pneg %p172
        %p315 = pneg %p169
        %p316 = pneg %p198
        %p317 = pneg %p195
        %s318 = sand.u32 %s185, 1
        %s319 = scalar_lea.sflag [#allocation4], %s318
        %s320 = sand.u32 %s185, 1
        %s321 = smul.addr %s320, 8
        %s322 = scalar_lea.vmem [#allocation8], %s321
        %v324 = vld [vmem:[%s284] sm:$0xff]
        %325 = vadd.xlane.f32.xlu0 %v324
        %v326 = vpop.xlane.xlu0 %325
        %v327 = vmul.f32 %v326, 0.03125
        %v328 = vmul.f32 %v324, %v324
        %329 = vadd.xlane.f32.xlu0 %v328
        %v330 = vpop.xlane.xlu0 %329
        %v331 = vmul.f32 %v330, 0.03125
        %v332 = vmul.f32 %v327, %v327
        %v333 = vsub.f32 %v331, %v332
        %v334 = vsub.f32 %v324, %v327
        %v335 = vadd.f32 %v333, 1e-05
        %v336 = vrsqrt.pop %v335
        %v337 = vmul.f32 %v334, %v336
        %v338 = vld [vmem:[%s1] sm:$0x1]
        %v340 = vlaneseq
        %v341 = vshrl.u32 %v340, 7
        %v342 = vsub.s32 0, %v341
        %v343 = vrot.slane %v338, %v342
        %v345 = vmul.f32 %v337, %v343
        %v346 = vld [vmem:[%s2] sm:$0x1]
        %v348 = vlaneseq
        %v349 = vshrl.u32 %v348, 7
        %v350 = vsub.s32 0, %v349
        %v351 = vrot.slane %v346, %v350
        %v353 = vadd.f32 %v345, %v351
        %v354 = vpack.c.bf16 %v353, %v353
        %v355 = vld [vmem:[#allocation5] sm:$0xf]
        %v356 = vld [vmem:[#allocation5 + $0x4] sm:$0xf]
        %v357 = vld [vmem:[#allocation5 + $0x8] sm:$0xf]
        %v358 = vld [vmem:[#allocation5 + $0xc] sm:$0xf]
        %v359 = vld [vmem:[#allocation5 + $0x10] sm:$0xf]
        %v360 = vld [vmem:[#allocation5 + $0x14] sm:$0xf]
        %v361 = vld [vmem:[#allocation5 + $0x18] sm:$0xf]
        %v362 = vld [vmem:[#allocation5 + $0x1c] sm:$0xf]
        %v363 = vld [vmem:[#allocation5 + $0x20] sm:$0xf]
        %v364 = vld [vmem:[#allocation5 + $0x24] sm:$0xf]
        %v365 = vld [vmem:[#allocation5 + $0x28] sm:$0xf]
        %v366 = vld [vmem:[#allocation5 + $0x2c] sm:$0xf]
        %v367 = vld [vmem:[#allocation5 + $0x30] sm:$0xf]
        %v368 = vld [vmem:[#allocation5 + $0x34] sm:$0xf]
        %v369 = vld [vmem:[#allocation5 + $0x38] sm:$0xf]
        %v370 = vld [vmem:[#allocation5 + $0x3c] sm:$0xf]
        %v371 = vld [vmem:[%s4] sm:$0x1]
        %v373 = vlaneseq
        %v374 = vshrl.u32 %v373, 7
        %v375 = vsub.s32 0, %v374
        %v376 = vrot.slane %v371, %v375
        %v394 = vunpack.c.l.b16 %v355
        %v395 = vunpack.c.l.b16 %v356
        %v396 = vunpack.c.l.b16 %v357
        %v397 = vunpack.c.l.b16 %v358
        %v398 = vunpack.c.l.b16 %v359
        %v399 = vunpack.c.l.b16 %v360
        %v400 = vunpack.c.l.b16 %v361
        %v401 = vunpack.c.l.b16 %v362
        %v402 = vunpack.c.l.b16 %v363
        %v403 = vunpack.c.l.b16 %v364
        %v404 = vunpack.c.l.b16 %v365
        %v405 = vunpack.c.l.b16 %v366
        %v406 = vunpack.c.l.b16 %v367
        %v407 = vunpack.c.l.b16 %v368
        %v408 = vunpack.c.l.b16 %v369
        %v409 = vunpack.c.l.b16 %v370
        %v410 = vpack.c.b16 %v395, %v394
        %v411 = vpack.c.b16 %v397, %v396
        %v412 = vpack.c.b16 %v399, %v398
        %v413 = vpack.c.b16 %v401, %v400
        %v414 = vpack.c.b16 %v403, %v402
        %v415 = vpack.c.b16 %v405, %v404
        %v416 = vpack.c.b16 %v407, %v406
        %v417 = vpack.c.b16 %v409, %v408
        %426 = vmatprep.subr.bf16.mxu0 0
        %427 = vmatpush1.bf16.msra.mxu0 %v410
        %428 = vmatprep.subr.bf16.mxu0 0
        %429 = vmatpush1.bf16.msra.mxu0 %v411
        %430 = vmatprep.subr.bf16.mxu0 0
        %431 = vmatpush1.bf16.msra.mxu0 %v412
        %432 = vmatprep.subr.bf16.mxu0 0
        %433 = vmatpush1.bf16.msra.mxu0 %v413
        %434 = vmatprep.subr.bf16.mxu0 0
        %435 = vmatpush1.bf16.msra.mxu0 %v414
        %436 = vmatprep.subr.bf16.mxu0 0
        %437 = vmatpush1.bf16.msra.mxu0 %v415
        %438 = vmatprep.subr.bf16.mxu0 0
        %439 = vmatpush1.bf16.msra.mxu0 %v416
        %440 = vmatprep.subr.bf16.mxu0 0
        %441 = vmatpush1.bf16.msra.mxu0 %v417
        %442 = vmatprep.subr.bf16.mxu0 0
        %443 = vmatpush1.bf16.msra.mxu0 0
        %444 = vmatprep.subr.bf16.mxu0 0
        %445 = vmatpush1.bf16.msra.mxu0 0
        %446 = vmatprep.subr.bf16.mxu0 0
        %447 = vmatpush1.bf16.msra.mxu0 0
        %448 = vmatprep.subr.bf16.mxu0 0
        %449 = vmatpush1.bf16.msra.mxu0 0
        %450 = vmatprep.subr.bf16.mxu0 0
        %451 = vmatpush1.bf16.msra.mxu0 0
        %452 = vmatprep.subr.bf16.mxu0 0
        %453 = vmatpush1.bf16.msra.mxu0 0
        %454 = vmatprep.subr.bf16.mxu0 0
        %455 = vmatpush1.bf16.msra.mxu0 0
        %456 = vmatprep.subr.bf16.mxu0 0
        %457 = vmatpush1.bf16.msra.mxu0 0
        %458 = vmatprep.mubr.bf16.mxu0 0
        %459 = vmatmul.mubr.bf16.gmra.mrb[0].mxu0 %v354
        %v460 = vpop.f32.mrb[0].mxu0
        %v461 = vadd.f32 %v376, %v460
        %v462 = vpop.f32.mrb[0].mxu0
        %v463 = vpop.f32.mrb[0].mxu0
        %v464 = vpop.f32.mrb[0].mxu0
        %465 = vdwg.mxu0
        %v466 = vmax.f32 %v461, 0.0
        %v467 = vpack.c.bf16 %v466, %v466
        %v468 = vld [vmem:[#allocation7] sm:$0xf]
        %v469 = vld [vmem:[#allocation7 + $0x4] sm:$0xf]
        %v470 = vld [vmem:[#allocation7 + $0x8] sm:$0xf]
        %v471 = vld [vmem:[#allocation7 + $0xc] sm:$0xf]
        %v472 = vld [vmem:[#allocation7 + $0x10] sm:$0xf]
        %v473 = vld [vmem:[#allocation7 + $0x14] sm:$0xf]
        %v474 = vld [vmem:[#allocation7 + $0x18] sm:$0xf]
        %v475 = vld [vmem:[#allocation7 + $0x1c] sm:$0xf]
        %v476 = vld [vmem:[#allocation7 + $0x20] sm:$0xf]
        %v477 = vld [vmem:[#allocation7 + $0x24] sm:$0xf]
        %v478 = vld [vmem:[#allocation7 + $0x28] sm:$0xf]
        %v479 = vld [vmem:[#allocation7 + $0x2c] sm:$0xf]
        %v480 = vld [vmem:[#allocation7 + $0x30] sm:$0xf]
        %v481 = vld [vmem:[#allocation7 + $0x34] sm:$0xf]
        %v482 = vld [vmem:[#allocation7 + $0x38] sm:$0xf]
        %v483 = vld [vmem:[#allocation7 + $0x3c] sm:$0xf]
        %v484 = vld [vmem:[%s6] sm:$0x1]
        %v486 = vlaneseq
        %v487 = vshrl.u32 %v486, 7
        %v488 = vsub.s32 0, %v487
        %v489 = vrot.slane %v484, %v488
        %v507 = vunpack.c.l.b16 %v468
        %v508 = vunpack.c.l.b16 %v469
        %v509 = vunpack.c.l.b16 %v470
        %v510 = vunpack.c.l.b16 %v471
        %v511 = vunpack.c.l.b16 %v472
        %v512 = vunpack.c.l.b16 %v473
        %v513 = vunpack.c.l.b16 %v474
        %v514 = vunpack.c.l.b16 %v475
        %v515 = vunpack.c.l.b16 %v476
        %v516 = vunpack.c.l.b16 %v477
        %v517 = vunpack.c.l.b16 %v478
        %v518 = vunpack.c.l.b16 %v479
        %v519 = vunpack.c.l.b16 %v480
        %v520 = vunpack.c.l.b16 %v481
        %v521 = vunpack.c.l.b16 %v482
        %v522 = vunpack.c.l.b16 %v483
        %v523 = vpack.c.b16 %v508, %v507
        %v524 = vpack.c.b16 %v510, %v509
        %v525 = vpack.c.b16 %v512, %v511
        %v526 = vpack.c.b16 %v514, %v513
        %v527 = vpack.c.b16 %v516, %v515
        %v528 = vpack.c.b16 %v518, %v517
        %v529 = vpack.c.b16 %v520, %v519
        %v530 = vpack.c.b16 %v522, %v521
        %539 = vmatprep.subr.bf16.mxu0 0
        %540 = vmatpush1.bf16.msra.mxu0 %v523
        %541 = vmatprep.subr.bf16.mxu0 0
        %542 = vmatpush1.bf16.msra.mxu0 %v524
        %543 = vmatprep.subr.bf16.mxu0 0
        %544 = vmatpush1.bf16.msra.mxu0 %v525
        %545 = vmatprep.subr.bf16.mxu0 0
        %546 = vmatpush1.bf16.msra.mxu0 %v526
        %547 = vmatprep.subr.bf16.mxu0 0
        %548 = vmatpush1.bf16.msra.mxu0 %v527
        %549 = vmatprep.subr.bf16.mxu0 0
        %550 = vmatpush1.bf16.msra.mxu0 %v528
        %551 = vmatprep.subr.bf16.mxu0 0
        %552 = vmatpush1.bf16.msra.mxu0 %v529
        %553 = vmatprep.subr.bf16.mxu0 0
        %554 = vmatpush1.bf16.msra.mxu0 %v530
        %555 = vmatprep.subr.bf16.mxu0 0
        %556 = vmatpush1.bf16.msra.mxu0 0
        %557 = vmatprep.subr.bf16.mxu0 0
        %558 = vmatpush1.bf16.msra.mxu0 0
        %559 = vmatprep.subr.bf16.mxu0 0
        %560 = vmatpush1.bf16.msra.mxu0 0
        %561 = vmatprep.subr.bf16.mxu0 0
        %562 = vmatpush1.bf16.msra.mxu0 0
        %563 = vmatprep.subr.bf16.mxu0 0
        %564 = vmatpush1.bf16.msra.mxu0 0
        %565 = vmatprep.subr.bf16.mxu0 0
        %566 = vmatpush1.bf16.msra.mxu0 0
        %567 = vmatprep.subr.bf16.mxu0 0
        %568 = vmatpush1.bf16.msra.mxu0 0
        %569 = vmatprep.subr.bf16.mxu0 0
        %570 = vmatpush1.bf16.msra.mxu0 0
        %571 = vmatprep.mubr.bf16.mxu0 0
        %572 = vmatmul.mubr.bf16.gmra.mrb[0].mxu0 %v467
        %v573 = vpop.f32.mrb[0].mxu0
        %v574 = vadd.f32 %v489, %v573
        %v575 = vpop.f32.mrb[0].mxu0
        %v576 = vpop.f32.mrb[0].mxu0
        %v577 = vpop.f32.mrb[0].mxu0
        %578 = vdwg.mxu0
        %v579 = vadd.f32 %v574, %v324
        %580 = vst [vmem:[%s322] sm:$0xff] %v579
        %s581 = sand.u32 %s185, 1
        %s582 = scalar_lea.sflag [#allocation4], %s581
        %s583 = sand.u32 %s185, 1
        %s584 = smul.addr %s583, 8
        %s585 = scalar_lea.vmem [#allocation8], %s584
        // Predicated region
        $region61: #{tpu_custom_call.1} parent=47 // pred_check
          %p586 = pneg %p195
        $region62: #{tpu_custom_call.1} parent=47 // pred_check_branch
          %588 = sbr.rel (%p586) target = $region64
        $region63: #{tpu_custom_call.1} parent=47 // pred_region
          %s590 = ssub.s32 128, 128
          %591 = vsyncadd %s582, %s590
          %s592 = smul.addr %s25, 128
          %s593 = scalar_lea.hbm %s7, %s592
          %s595 = sshll.u32 %s585, 4
          %s596 = int_to_ptr.vmem [resolvable:$true] %s595
          %598 = dma.vmem_to_hbm [thread:$0]  %s596, 128, %s593, %s582
        $region64: #{tpu_custom_call.1} parent=47 // pred_fallthru
          _
      $region48: #{tpu_custom_call.1} parent=5 // pred_fallthru
        _
      %p599 = scmp.le.s32.totalorder 2, %s20
      // Predicated region
      $region65: #{tpu_custom_call.1} parent=5 // pred_check
        %p600 = pneg %p599
      $region66: #{tpu_custom_call.1} parent=5 // pred_check_branch
        %602 = sbr.rel (%p600) target = $region68
      $region67: #{tpu_custom_call.1} parent=5 // pred_region
        %s603 = ssub.s32 %s20, 2
        // Predicated region
        $region69: #{tpu_custom_call.1} parent=67 // pred_check
          %p604 = pneg %p201
        $region70: #{tpu_custom_call.1} parent=67 // pred_check_branch
          %606 = sbr.rel (%p604) target = $region72
        $region71: #{tpu_custom_call.1} parent=67 // pred_region
          %s607 = sand.u32 %s186, 1
          %s608 = scalar_lea.sflag [#allocation4], %s607
          %s609 = sand.u32 %s186, 1
          %s610 = smul.addr %s609, 8
          %s611 = scalar_lea.vmem [#allocation8], %s610
          %612 = dma.done %s608, 128
        $region72: #{tpu_custom_call.1} parent=67 // pred_fallthru
          _
      $region68: #{tpu_custom_call.1} parent=5 // pred_fallthru
        _
    $region6: #{tpu_custom_call.1} parent=1 // loop_footer
      %s24 = sadd.s32 1, %s20
    $region7: #{tpu_custom_call.1} parent=1 // loop_footer_branch
      %19 = sbr.rel target = $region3
    $region8: #{tpu_custom_call.1} parent=1 // loop_exit
      _
    %613 = vsyncpa [#allocation3], 1
    %s614 = scalar_lea.sflag [#allocation3], 1
    %615 = vsyncpa %s614, 1
    %616 = vsyncpa [#allocation6], 1
    %617 = vsyncpa [#allocation4], 1
    %s618 = scalar_lea.sflag [#allocation4], 1
    %619 = vsyncpa %s618, 1

</llo_original>
